<compile_context>
chip_gen: v7x
topology: tpu7x:2x2x1
jax: 0.10.0
libtpu: 0.0.40
codegen_flags: <defaults>
</compile_context>

<pallas_src>
import functools

import numpy as np

import jax
import jax.numpy as jnp
from jax.experimental import pallas as pl
from jax.experimental.pallas import tpu as pltpu


def _cdiv(a, b):
    return -(-a // b)


def _vmem_capacity_bytes():
    """Physical VMEM per TensorCore; falls back to 128 MiB (v5e/v6e) off-TPU."""
    try:
        info = pltpu.get_tpu_info()
        cap = getattr(info, "vmem_capacity_bytes", None)
        if cap:
            return int(cap)
    except Exception:
        pass
    return 128 << 20


def _choose_tiles(BH, Nq, Nk, Dc, in_itemsize, out_itemsize, use_bias, budget):
    """Pick (TB, TQ) so the per-step working set (double-buffered Q/K/out
    blocks + live f32 temporaries) stays under `budget` bytes, keeping the
    query-tile pad waste <= ~10% and >= 4 grid steps when possible."""

    def est(tb, tq):
        q_b = 2 * tb * tq * Dc * in_itemsize          # double-buffered Q block
        k_b = 2 * tb * Nk * Dc * in_itemsize          # K block (resident across qi)
        o_b = 2 * tb * tq * Nk * out_itemsize         # double-buffered output block
        tmp = 3 * tb * tq * Nk * 4                    # dots / exp / normalized f32 temps
        b_b = 2 * tb * Nk * 4 if use_bias else 0
        return q_b + k_b + o_b + tmp + b_b + 2 * Dc * 4

    if Nq < 8:
        cands = [Nq]                                  # full-dim query block (allowed)
    else:
        base = [8, 16, 24, 32, 48, 64, 96, 128, 192, 256, 384, 512, 768, 1024]
        cands = [t for t in base if t <= Nq]
        if Nq % 8 == 0 and Nq <= 1024 and Nq not in cands:
            cands.append(Nq)                          # exact fit, zero waste

    fitting = [t for t in cands if est(1, t) <= budget] or [min(cands)]

    def waste(t):
        return (_cdiv(Nq, t) * t - Nq) / float(Nq)

    good = [t for t in fitting if waste(t) <= 0.10]
    TQ = max(good) if good else min(fitting, key=lambda t: (waste(t), -t))

    TB = 1
    if _cdiv(Nq, TQ) == 1 and BH > 1:
        for cand in (32, 16, 8, 4, 2):
            # Keep >= 4 total grid steps so both v7x TensorCores (and the
            # software pipeline) always get work.
            if BH % cand == 0 and BH // cand >= 4 and est(cand, TQ) <= budget:
                TB = cand
                break
    return TB, TQ, est(TB, TQ)


def _attention_map_kernel(scale_ref, *refs, use_bias, approx_recip):
    # refs = (q_ref, k_ref, [bias_ref,] o_ref)
    if use_bias:
        q_ref, k_ref, bias_ref, o_ref = refs
    else:
        q_ref, k_ref, o_ref = refs

    q = q_ref[...]                                    # (TB, TQ, Dc)
    k = k_ref[...]                                    # (TB, Nk, Dc)

    # Apply 1/sqrt(d) (per-column: scale | rel_scale) on the small (TQ, Dc)
    # operand instead of the (TQ, Nk) scores.  scale_ref is a real kernel
    # input (not a captured constant).
    qs = q * scale_ref[...].astype(q.dtype)

    # Single fused contraction over D (+ Dp); MXU runs in the input dtype
    # with f32 accumulation (transposed-RHS path, no K transpose needed).
    dots = jnp.einsum("bqd,bkd->bqk", qs, k,
                      preferred_element_type=jnp.float32)   # (TB, TQ, Nk) f32

    if use_bias:
        dots = dots + bias_ref[...]                   # (TB, 1, Nk): 0 or -inf

    # Numerically stable softmax over the keys axis.
    row_max = jnp.max(dots, axis=-1, keepdims=True)
    e = jnp.exp(dots - row_max)
    denom = jnp.sum(e, axis=-1, keepdims=True)
    inv = pl.reciprocal(denom, approx=approx_recip)
    o_ref[...] = (e * inv).astype(o_ref.dtype)


class AttentionMapPallas:
    """JAX/Pallas equivalent of the PyTorch AttentionMap module."""

    def __init__(self, dim_head, relative_pos=False, rel_pos_dim_head=None,
                 approx_softmax_reciprocal=False):
        self.scale = float(dim_head) ** (-0.5)
        self.relative_pos = relative_pos
        self.rel_pos_scale = (
            float(rel_pos_dim_head) ** (-0.5) if relative_pos else None)
        self.approx_recip = approx_softmax_reciprocal

    def __call__(self, keys, queries, pos_key=None, pos_query=None, mask=None,
                 out_dtype=None):
        ndim = queries.ndim
        if ndim == 3:
            B, H = queries.shape[0], 1
        elif ndim == 4:
            B, H = queries.shape[0], queries.shape[1]
        else:
            raise ValueError("queries must be 3-D or 4-D")

        def flat(x):
            return x.reshape((B * H,) + x.shape[-2:])

        q = flat(queries)                      # keep caller dtype (no upcast)
        k = flat(keys)
        BH, Nq, D = q.shape
        Nk = k.shape[1]

        if self.relative_pos:
            pq = flat(pos_query).astype(q.dtype)
            pk = flat(pos_key).astype(k.dtype)
            Dp = pq.shape[-1]
            # Fuse the two matmuls into a single contraction over D + Dp.
            q = jnp.concatenate([q, pq], axis=-1)
            k = jnp.concatenate([k, pk], axis=-1)
            col_scale = np.concatenate(
                [np.full((D,), self.scale, np.float32),
                 np.full((Dp,), self.rel_pos_scale, np.float32)])
        else:
            col_scale = np.full((D,), self.scale, np.float32)
        Dc = q.shape[-1]
        # Passed as a kernel input (captured array constants are rejected).
        # Note: it is cast to the input dtype inside the kernel, so with bf16
        # inputs the 1/sqrt(d) scales are bf16-quantized (documented).
        col_scale = jnp.asarray(col_scale.reshape(1, 1, Dc))

        if out_dtype is None:
            out_dtype = queries.dtype   # pass jnp.bfloat16 to halve output HBM bytes
        out_itemsize = jnp.dtype(out_dtype).itemsize
        in_itemsize = jnp.dtype(q.dtype).itemsize

        # Additive bias only when a mask is given (keys are never padded):
        # 0 for attendable keys, -inf for masked keys.
        use_bias = mask is not None
        bias = None
        if use_bias:
            m = mask
            if m.ndim == 2:                                  # (B, Nk)
                m = jnp.broadcast_to(m[:, None, :], (B, H, Nk))
            m = m.reshape(BH, 1, Nk).astype(jnp.bool_)
            bias = jnp.where(m, 0.0, -jnp.inf).astype(jnp.float32)

        # Generation-aware VMEM policy: v7x has 64 MiB/TC, v5e/v6e 128 MiB.
        vmem_cap = _vmem_capacity_bytes()
        vmem_cap_usable = min(vmem_cap - (8 << 20), 100 << 20)   # ~56 MiB v7x, ~100 MiB v5e/v6e
        budget = int(vmem_cap_usable * 0.85)

        TB, TQ, est = _choose_tiles(BH, Nq, Nk, Dc, in_itemsize, out_itemsize,
                                    use_bias, budget)
        n_q_tiles = _cdiv(Nq, TQ)
        vmem_limit = int(min(vmem_cap_usable, max(32 << 20, 2 * est)))

        kernel = functools.partial(
            _attention_map_kernel,
            use_bias=use_bias,
            approx_recip=self.approx_recip,
        )

        # Q / out blocks move with (bh, qi); K / bias / col_scale are indexed
        # only by bh (or constant), so they stay VMEM-resident across the
        # inner query-tile axis.  K/bias could additionally be single-buffered
        # (pipeline_mode=pl.Buffered(1)) to free more VMEM; kept at the
        # default double buffering for portability.
        in_specs = [
            pl.BlockSpec((1, 1, Dc), lambda b, qi: (0, 0, 0)),
            pl.BlockSpec((TB, TQ, Dc), lambda b, qi: (b, qi, 0)),
            pl.BlockSpec((TB, Nk, Dc), lambda b, qi: (b, 0, 0)),
        ]
        inputs = [col_scale, q, k]
        if use_bias:
            in_specs.append(
                pl.BlockSpec((TB, 1, Nk), lambda b, qi: (b, 0, 0)))
            inputs.append(bias)

        # Output is written at the true (Nq, Nk) extent: the last block dim is
        # the full Nk (masked tail store when Nk % 128 != 0), and a partial
        # edge block handles Nq % TQ != 0 — no post-kernel slice copy.
        out = pl.pallas_call(
            kernel,
            out_shape=jax.ShapeDtypeStruct((BH, Nq, Nk), out_dtype),
            grid_spec=pltpu.PrefetchScalarGridSpec(
                num_scalar_prefetch=0,
                grid=(BH // TB, n_q_tiles),
                in_specs=in_specs,
                out_specs=pl.BlockSpec((TB, TQ, Nk), lambda b, qi: (b, qi, 0)),
            ),
            compiler_params=pltpu.CompilerParams(
                dimension_semantics=("parallel", "parallel"),
                vmem_limit_bytes=vmem_limit,
            ),
        )(*inputs)

        if ndim == 3:
            return out.reshape(B, Nq, Nk)
        return out.reshape(B, H, Nq, Nk)


def _reference(module, keys, queries, pos_key, pos_query, mask):
    """Pure-JAX reference reproducing the PyTorch forward."""
    dots = jnp.matmul(queries, jnp.swapaxes(keys, -2, -1)) * module.scale
    if module.relative_pos:
        dots = dots + jnp.matmul(
            pos_query, jnp.swapaxes(pos_key, -2, -1)) * module.rel_pos_scale
    if mask is not None:
        if dots.ndim == 3:
            m = mask[:, None, :]
        else:
            m = mask[:, None, None, :]
        dots = jnp.where(m, dots, -jnp.inf)
    return jax.nn.softmax(dots, axis=-1)


if __name__ == "__main__":
    key = jax.random.PRNGKey(0)
    B, H, Nq, Nk = 2, 2, 8, 16
    dim_head, rel_pos_dim_head = 32, 16

    k1, k2, k3, k4, k5 = jax.random.split(key, 5)
    keys_t = jax.random.normal(k1, (B, H, Nk, dim_head), jnp.float32)
    queries_t = jax.random.normal(k2, (B, H, Nq, dim_head), jnp.float32)
    pos_key_t = jax.random.normal(k3, (B, H, Nk, rel_pos_dim_head), jnp.float32)
    pos_query_t = jax.random.normal(k4, (B, H, Nq, rel_pos_dim_head), jnp.float32)
    # Boolean mask over keys, (B, Nk); ensure every row has at least one True.
    mask_t = jax.random.bernoulli(k5, 0.7, (B, Nk)).at[:, 0].set(True)

    # 4-D path, relative positions + mask, exact softmax reciprocal.
    module = AttentionMapPallas(dim_head, relative_pos=True,
                                rel_pos_dim_head=rel_pos_dim_head)
    out = jax.block_until_ready(
        module(keys_t, queries_t, pos_key=pos_key_t, pos_query=pos_query_t,
               mask=mask_t))
    ref = _reference(module, keys_t, queries_t, pos_key_t, pos_query_t, mask_t)
    assert out.shape == (B, H, Nq, Nk)
    assert jnp.allclose(out, ref, atol=1e-5, rtol=1e-5), "mismatch (4-D rel+mask)"

    # Approximate (EUP vrcp) reciprocal path.
    module_a = AttentionMapPallas(dim_head, relative_pos=True,
                                  rel_pos_dim_head=rel_pos_dim_head,
                                  approx_softmax_reciprocal=True)
    out_a = jax.block_until_ready(
        module_a(keys_t, queries_t, pos_key=pos_key_t, pos_query=pos_query_t,
                 mask=mask_t))
    assert jnp.allclose(out_a, ref, atol=2e-2, rtol=2e-2), "mismatch (approx recip)"

    # 3-D (no heads) path, no mask, no relative positions.
    module3 = AttentionMapPallas(dim_head)
    out3 = jax.block_until_ready(module3(keys_t[:, 0], queries_t[:, 0]))
    ref3 = _reference(module3, keys_t[:, 0], queries_t[:, 0], None, None, None)
    assert jnp.allclose(out3, ref3, atol=1e-5, rtol=1e-5), "mismatch (3-D path)"

    # bf16 inputs go straight to the MXU (f32 accumulation) — loose tolerance
    # (input + scale quantization only).
    kb = keys_t.astype(jnp.bfloat16)
    qb = queries_t.astype(jnp.bfloat16)
    pkb = pos_key_t.astype(jnp.bfloat16)
    pqb = pos_query_t.astype(jnp.bfloat16)
    out_b = jax.block_until_ready(
        module(kb, qb, pos_key=pkb, pos_query=pqb, mask=mask_t,
               out_dtype=jnp.float32))
    ref_b = _reference(module, kb.astype(jnp.float32), qb.astype(jnp.float32),
                       pkb.astype(jnp.float32), pqb.astype(jnp.float32), mask_t)
    assert out_b.shape == (B, H, Nq, Nk)
    assert jnp.allclose(out_b, ref_b, atol=5e-2, rtol=5e-2), "mismatch (bf16)"

    print("KERNEL_OK")
</pallas_src>

<mosaic_0001>
module attributes {stable_mosaic.version = 11 : i64} {
  func.func @_attention_map_kernel(%arg0: i32, %arg1: i32, %arg2: memref<1x1x48xf32, #tpu.memory_space<vmem>>, %arg3: memref<1x8x48xf32, #tpu.memory_space<vmem>>, %arg4: memref<1x16x48xf32, #tpu.memory_space<vmem>>, %arg5: memref<1x1x16xf32, #tpu.memory_space<vmem>>, %arg6: memref<1x8x16xf32, #tpu.memory_space<vmem>>) attributes {dimension_semantics = [#tpu.dimension_semantics<parallel>, #tpu.dimension_semantics<parallel>], iteration_bounds = array<i64: 4, 1>, scalar_prefetch = 0 : i64, scratch_operands = 0 : i64, tpu.core_type = #tpu.core_type<tc>, window_params = [{pipeline_mode = #tpu.pipeline_mode<synchronous>, transform_indices = @transform_0, window_bounds = array<i64: 1, 1, 48>}, {transform_indices = @transform_1, window_bounds = array<i64: 1, 8, 48>}, {transform_indices = @transform_2, window_bounds = array<i64: 1, 16, 48>}, {transform_indices = @transform_3, window_bounds = array<i64: 1, 1, 16>}, {transform_indices = @transform_4, window_bounds = array<i64: 1, 8, 16>}]} {
    %c0 = arith.constant 0 : index
    %c0_0 = arith.constant 0 : index
    %c0_1 = arith.constant 0 : index
    %0 = vector.load %arg3[%c0, %c0_0, %c0_1] : memref<1x8x48xf32, #tpu.memory_space<vmem>>, vector<1x8x48xf32>
    %c0_2 = arith.constant 0 : index
    %c0_3 = arith.constant 0 : index
    %c0_4 = arith.constant 0 : index
    %1 = vector.load %arg4[%c0_2, %c0_3, %c0_4] : memref<1x16x48xf32, #tpu.memory_space<vmem>>, vector<1x16x48xf32>
    %c0_5 = arith.constant 0 : index
    %c0_6 = arith.constant 0 : index
    %c0_7 = arith.constant 0 : index
    %2 = vector.load %arg2[%c0_5, %c0_6, %c0_7] : memref<1x1x48xf32, #tpu.memory_space<vmem>>, vector<1x1x48xf32>
    %3 = vector.broadcast %2 : vector<1x1x48xf32> to vector<1x8x48xf32>
    %4 = arith.mulf %0, %3 : vector<1x8x48xf32>
    "tpu.trace_start"() <{level = 10 : i32, message = "bqd,bkd->bqk"}> : () -> ()
    %cst = arith.constant dense<0.000000e+00> : vector<1x8x16xf32>
    %5 = tpu.matmul %4, %1, %cst {dimension_numbers = #tpu.dot_dimension_numbers<[2], [2], [1], [1], [0, 0, 0, 1, 1, 1], [0], [0]>} : vector<1x8x48xf32>, vector<1x16x48xf32>, vector<1x8x16xf32> -> vector<1x8x16xf32>
    "tpu.trace_stop"() : () -> ()
    %c0_8 = arith.constant 0 : index
    %c0_9 = arith.constant 0 : index
    %c0_10 = arith.constant 0 : index
    %6 = vector.load %arg5[%c0_8, %c0_9, %c0_10] : memref<1x1x16xf32, #tpu.memory_space<vmem>>, vector<1x1x16xf32>
    %7 = vector.broadcast %6 : vector<1x1x16xf32> to vector<1x8x16xf32>
    %8 = arith.addf %5, %7 : vector<1x8x16xf32>
    %cst_11 = arith.constant dense<0xFF800000> : vector<1x8xf32>
    %9 = vector.multi_reduction <maximumf>, %8, %cst_11 [2] : vector<1x8x16xf32> to vector<1x8xf32>
    %10 = vector.shape_cast %9 : vector<1x8xf32> to vector<1x8x1xf32>
    %11 = vector.broadcast %10 : vector<1x8x1xf32> to vector<1x8x16xf32>
    %12 = arith.subf %8, %11 : vector<1x8x16xf32>
    %13 = math.exp %12 : vector<1x8x16xf32>
    %cst_12 = arith.constant dense<0.000000e+00> : vector<1x8xf32>
    %14 = vector.multi_reduction <add>, %13, %cst_12 [2] : vector<1x8x16xf32> to vector<1x8xf32>
    %15 = vector.shape_cast %14 : vector<1x8xf32> to vector<1x8x1xf32>
    %16 = tpu.reciprocal %15 : vector<1x8x1xf32> -> vector<1x8x1xf32>
    %17 = vector.broadcast %16 : vector<1x8x1xf32> to vector<1x8x16xf32>
    %18 = arith.mulf %13, %17 : vector<1x8x16xf32>
    %c0_13 = arith.constant 0 : index
    %c0_14 = arith.constant 0 : index
    %c0_15 = arith.constant 0 : index
    %19 = vector.load %arg6[%c0_13, %c0_14, %c0_15] : memref<1x8x16xf32, #tpu.memory_space<vmem>>, vector<1x8x16xf32>
    tpu.vector_store %arg6[%c0_13, %c0_14, %c0_15], %18 {strides = array<i32>} : memref<1x8x16xf32, #tpu.memory_space<vmem>>, vector<1x8x16xf32>,
    return
  }
  func.func @transform_0(%arg0: i32, %arg1: i32) -> (i32, i32, i32) {
    %c0_i32 = arith.constant 0 : i32
    %c0_i32_0 = arith.constant 0 : i32
    %c0_i32_1 = arith.constant 0 : i32
    %c0_i32_2 = arith.constant 0 : i32
    return %c0_i32, %c0_i32_0, %c0_i32_1 : i32, i32, i32
  }
  func.func @transform_1(%arg0: i32, %arg1: i32) -> (i32, i32, i32) {
    %c0_i32 = arith.constant 0 : i32
    %c0_i32_0 = arith.constant 0 : i32
    return %arg0, %arg1, %c0_i32 : i32, i32, i32
  }
  func.func @transform_2(%arg0: i32, %arg1: i32) -> (i32, i32, i32) {
    %c0_i32 = arith.constant 0 : i32
    %c0_i32_0 = arith.constant 0 : i32
    %c0_i32_1 = arith.constant 0 : i32
    return %arg0, %c0_i32, %c0_i32_0 : i32, i32, i32
  }
  func.func @transform_3(%arg0: i32, %arg1: i32) -> (i32, i32, i32) {
    %c0_i32 = arith.constant 0 : i32
    %c0_i32_0 = arith.constant 0 : i32
    %c0_i32_1 = arith.constant 0 : i32
    return %arg0, %c0_i32, %c0_i32_0 : i32, i32, i32
  }
  func.func @transform_4(%arg0: i32, %arg1: i32) -> (i32, i32, i32) {
    %c0_i32 = arith.constant 0 : i32
    %c0_i32_0 = arith.constant 0 : i32
    return %arg0, %arg1, %c0_i32 : i32, i32, i32
  }
}

</mosaic_0001>

<llo_original>
// kernel: tpu_custom_call.1
$region0: #{tpu_custom_call.1}
  #allocation0 [shape = 'u32[]', space=smem, size = 0x4, offset = 0x4, fixed_abs, tag = 'smem constant byte address 0x4 - core index']
  #allocation1 [shape = 'u32[144,128]{1,0:T(1,128)}', space=vmem, size = 0x12000, scoped, tag = 'internal scratch']
  %s0 = inlined_call_operand.hbm [shape: f32[1,1,48], index: 0, kind: input, shape index: {}]
  %s1 = inlined_call_operand.hbm [shape: f32[4,8,48], index: 1, kind: input, shape index: {}]
  %s2 = inlined_call_operand.hbm [shape: f32[4,16,48], index: 2, kind: input, shape index: {}]
  %s3 = inlined_call_operand.vmem [shape: f32[4,1,16], index: 3, kind: input, shape index: {}]
  %s4 = inlined_call_operand.hbm [shape: f32[4,8,16], index: 4, kind: output, shape index: {}]
  %s5 = sld [smem:[#allocation0]]
  $region61: #{tpu_custom_call.1} parent=0
    _
  %s7 = ssub.s32 1, %s5
  %s8 = scalar_select 0, %s7, %s5
  $region1: #{tpu_custom_call.1} parent=0
    #allocation2 [shape = 'u8[512]{0}', space=vmem, size = 0x400, scoped, tag = 'input window, operand 0, single buffered']
    #allocation3 [shape = 's32[2]{0}', space=sflag, size = 0x8, scoped, tag = 'scoped memory for tpu_custom_call.1']
    #allocation4 [shape = 's32[2]{0}', space=sflag, size = 0x8, scoped, tag = 'scoped memory for tpu_custom_call.1']
    #allocation5 [shape = 'u8[8192]{0}', space=vmem, size = 0x2000, scoped, tag = 'input window, operand 1']
    #allocation6 [shape = 's32[2]{0}', space=sflag, size = 0x8, scoped, tag = 'scoped memory for tpu_custom_call.1']
    #allocation7 [shape = 'u8[16384]{0}', space=vmem, size = 0x4000, scoped, tag = 'input window, operand 2']
    #allocation8 [shape = 'u8[8192]{0}', space=vmem, size = 0x2000, scoped, tag = 'output window, operand 0']
    %9 = vsyncpa [#allocation3], 0
    %10 = vsyncpa [#allocation6], 0
    %s11 = scalar_lea.sflag [#allocation6], 1
    %12 = vsyncpa %s11, 0
    %13 = vsyncpa [#allocation4], 0
    %s14 = scalar_lea.sflag [#allocation4], 1
    %15 = vsyncpa %s14, 0
    loop: start=0, step=1, limit=6
    $region2: #{tpu_custom_call.1} parent=1 // loop_pre_header
      _
    $region3: #{tpu_custom_call.1} parent=1 // loop_header
      %s17 = sphi 0, %s21
      %p18 = scmp.ge.s32.totalorder %s17, 6
      %s24 = sphi 0, %s36
      %s25 = sphi 0, %s32
      %s26 = sphi 0, %s24
      %s27 = sphi 0, %s25
      %s28 = sphi 0, %s26
      %s29 = sphi 0, %s27
      %s37 = sphi 0, %s37
      %s39 = sphi 0, %s37
      %s40 = sphi 0, %s39
      %s54 = sphi 0, %s40
      %s62 = sphi 0, %s64
      %s65 = sphi 0, %s62
      %s66 = sphi 0, %s65
      %s82 = sphi 0, %s66
      %s88 = sphi 0, %s90
      %s91 = sphi 0, %s88
      %s92 = sphi 0, %s91
      %s108 = sphi 0, %s92
      %s114 = sphi 0, %s116
      %s117 = sphi 0, %s114
      %s118 = sphi 0, %s117
      %s134 = sphi 0, %s118
      %s142 = sphi 0, %s144
      %s145 = sphi 0, %s142
      %s146 = sphi 0, %s145
      %s162 = sphi 0, %s146
    $region4: #{tpu_custom_call.1} parent=1 // loop_header_branch
      %20 = sbr.rel (%p18) target = $region8
    $region5: #{tpu_custom_call.1} parent=1 // loop_body
      %s22 = ssub.s32 %s17, 1
      %s23 = ssub.s32 %s17, 2
      %s30 = sadd.s32 1, %s25
      %p31 = scmp.ge.s32.totalorder %s30, 1
      %s32 = scalar_select %p31, 0, %s30
      %s33 = sadd.s32 1, %s24
      %s34 = scalar_select %p31, %s33, %s24
      %p35 = scmp.ge.s32.totalorder %s34, 4
      %s36 = scalar_select %p35, 0, %s34
      %s38 = sadd.s32 %s37, 1
      %p41 = scmp.eq.s32.totalorder %s17, 3
      %p42 = scmp.ne.s32.totalorder %s37, %s39
      %p43 = scmp.eq.s32.totalorder %s17, 0
      %p44 = por %p42, %p43
      %p45 = scmp.ne.s32.totalorder %s37, %s39
      %p46 = scmp.eq.s32.totalorder %s22, 3
      %p47 = por %p45, %p46
      %p48 = scmp.ne.s32.totalorder %s39, %s40
      %p49 = scmp.eq.s32.totalorder %s22, 0
      %p50 = por %p48, %p49
      %p51 = scmp.ne.s32.totalorder %s39, %s40
      %p52 = scmp.eq.s32.totalorder %s23, 3
      %p53 = por %p51, %p52
      %p55 = scmp.ne.s32.totalorder %s40, %s54
      %p56 = scmp.eq.s32.totalorder %s23, 0
      %p57 = por %p55, %p56
      %s58 = ssub.s32 %s24, %s36
      %s59 = ssub.s32 %s25, %s32
      %s60 = sor.u32 %s58, %s59
      %p61 = scmp.eq.s32.totalorder %s60, 0
      %s63 = sadd.s32 %s62, 1
      %s64 = scalar_select %p61, %s62, %s63
      %p67 = pneg %p61
      %p68 = scmp.eq.s32.totalorder %s17, 3
      %p69 = por %p67, %p68
      %p70 = scmp.ne.s32.totalorder %s62, %s65
      %p71 = scmp.eq.s32.totalorder %s17, 0
      %p72 = por %p70, %p71
      %p73 = scmp.ne.s32.totalorder %s62, %s65
      %p74 = scmp.eq.s32.totalorder %s22, 3
      %p75 = por %p73, %p74
      %p76 = scmp.ne.s32.totalorder %s65, %s66
      %p77 = scmp.eq.s32.totalorder %s22, 0
      %p78 = por %p76, %p77
      %p79 = scmp.ne.s32.totalorder %s65, %s66
      %p80 = scmp.eq.s32.totalorder %s23, 3
      %p81 = por %p79, %p80
      %p83 = scmp.ne.s32.totalorder %s66, %s82
      %p84 = scmp.eq.s32.totalorder %s23, 0
      %p85 = por %p83, %p84
      %s86 = ssub.s32 %s24, %s36
      %p87 = scmp.eq.s32.totalorder %s86, 0
      %s89 = sadd.s32 %s88, 1
      %s90 = scalar_select %p87, %s88, %s89
      %p93 = pneg %p87
      %p94 = scmp.eq.s32.totalorder %s17, 3
      %p95 = por %p93, %p94
      %p96 = scmp.ne.s32.totalorder %s88, %s91
      %p97 = scmp.eq.s32.totalorder %s17, 0
      %p98 = por %p96, %p97
      %p99 = scmp.ne.s32.totalorder %s88, %s91
      %p100 = scmp.eq.s32.totalorder %s22, 3
      %p101 = por %p99, %p100
      %p102 = scmp.ne.s32.totalorder %s91, %s92
      %p103 = scmp.eq.s32.totalorder %s22, 0
      %p104 = por %p102, %p103
      %p105 = scmp.ne.s32.totalorder %s91, %s92
      %p106 = scmp.eq.s32.totalorder %s23, 3
      %p107 = por %p105, %p106
      %p109 = scmp.ne.s32.totalorder %s92, %s108
      %p110 = scmp.eq.s32.totalorder %s23, 0
      %p111 = por %p109, %p110
      %s112 = ssub.s32 %s24, %s36
      %p113 = scmp.eq.s32.totalorder %s112, 0
      %s115 = sadd.s32 %s114, 1
      %s116 = scalar_select %p113, %s114, %s115
      %p119 = pneg %p113
      %p120 = scmp.eq.s32.totalorder %s17, 3
      %p121 = por %p119, %p120
      %p122 = scmp.ne.s32.totalorder %s114, %s117
      %p123 = scmp.eq.s32.totalorder %s17, 0
      %p124 = por %p122, %p123
      %p125 = scmp.ne.s32.totalorder %s114, %s117
      %p126 = scmp.eq.s32.totalorder %s22, 3
      %p127 = por %p125, %p126
      %p128 = scmp.ne.s32.totalorder %s117, %s118
      %p129 = scmp.eq.s32.totalorder %s22, 0
      %p130 = por %p128, %p129
      %p131 = scmp.ne.s32.totalorder %s117, %s118
      %p132 = scmp.eq.s32.totalorder %s23, 3
      %p133 = por %p131, %p132
      %p135 = scmp.ne.s32.totalorder %s118, %s134
      %p136 = scmp.eq.s32.totalorder %s23, 0
      %p137 = por %p135, %p136
      %s138 = ssub.s32 %s24, %s36
      %s139 = ssub.s32 %s25, %s32
      %s140 = sor.u32 %s138, %s139
      %p141 = scmp.eq.s32.totalorder %s140, 0
      %s143 = sadd.s32 %s142, 1
      %s144 = scalar_select %p141, %s142, %s143
      %p147 = pneg %p141
      %p148 = scmp.eq.s32.totalorder %s17, 3
      %p149 = por %p147, %p148
      %p150 = scmp.ne.s32.totalorder %s142, %s145
      %p151 = scmp.eq.s32.totalorder %s17, 0
      %p152 = por %p150, %p151
      %p153 = scmp.ne.s32.totalorder %s142, %s145
      %p154 = scmp.eq.s32.totalorder %s22, 3
      %p155 = por %p153, %p154
      %p156 = scmp.ne.s32.totalorder %s145, %s146
      %p157 = scmp.eq.s32.totalorder %s22, 0
      %p158 = por %p156, %p157
      %p159 = scmp.ne.s32.totalorder %s145, %s146
      %p160 = scmp.eq.s32.totalorder %s23, 3
      %p161 = por %p159, %p160
      %p163 = scmp.ne.s32.totalorder %s146, %s162
      %p164 = scmp.eq.s32.totalorder %s23, 0
      %p165 = por %p163, %p164
      %p166 = scmp.le.s32.totalorder 1, %s17
      %p167 = scmp.lt.s32.totalorder %s17, 5
      %p168 = pnand %p166, %p167
      %p169 = pneg %p168
      // Predicated region
      $region9: #{tpu_custom_call.1} parent=5 // pred_check
        _
      $region10: #{tpu_custom_call.1} parent=5 // pred_check_branch
        %171 = sbr.rel (%p168) target = $region12
      $region11: #{tpu_custom_call.1} parent=5 // pred_region
        %s172 = ssub.s32 %s17, 1
        // Predicated region
        $region13: #{tpu_custom_call.1} parent=11 // pred_check
          %p173 = pneg %p50
        $region14: #{tpu_custom_call.1} parent=11 // pred_check_branch
          %175 = sbr.rel (%p173) target = $region16
        $region15: #{tpu_custom_call.1} parent=11 // pred_region
          %s177 = ssub.s32 16, 16
          %178 = vsyncadd [#allocation3], %s177
          %s180 = sshll.u32 [#allocation2], 4
          %s181 = int_to_ptr.vmem [resolvable:$true] %s180
          %183 = dma.hbm_to_vmem [thread:$0]  %s0, 16, %s181, [#allocation3]
        $region16: #{tpu_custom_call.1} parent=11 // pred_fallthru
          _
      $region12: #{tpu_custom_call.1} parent=5 // pred_fallthru
        _
      %p184 = scmp.lt.s32.totalorder %s17, 4
      // Predicated region
      $region17: #{tpu_custom_call.1} parent=5 // pred_check
        %p185 = pneg %p184
      $region18: #{tpu_custom_call.1} parent=5 // pred_check_branch
        %187 = sbr.rel (%p185) target = $region20
      $region19: #{tpu_custom_call.1} parent=5 // pred_region
        // Predicated region
        $region21: #{tpu_custom_call.1} parent=19 // pred_check
          %p188 = pneg %p72
        $region22: #{tpu_custom_call.1} parent=19 // pred_check_branch
          %190 = sbr.rel (%p188) target = $region24
        $region23: #{tpu_custom_call.1} parent=19 // pred_region
          %s191 = sand.u32 %s17, 1
          %s192 = scalar_lea.sflag [#allocation6], %s191
          %s193 = sand.u32 %s62, 1
          %s194 = smul.addr %s193, 8
          %s195 = scalar_lea.vmem [#allocation5], %s194
          %s197 = ssub.s32 128, 128
          %198 = vsyncadd %s192, %s197
          %s199 = sadd.s32 %s25, %s24
          %s200 = smul.addr %s199, 128
          %s201 = scalar_lea.hbm %s1, %s200
          %s203 = sshll.u32 %s195, 4
          %s204 = int_to_ptr.vmem [resolvable:$true] %s203
          %206 = dma.hbm_to_vmem [thread:$0]  %s201, 128, %s204, %s192
        $region24: #{tpu_custom_call.1} parent=19 // pred_fallthru
          _
        // Predicated region
        $region25: #{tpu_custom_call.1} parent=19 // pred_check
          %p207 = pneg %p98
        $region26: #{tpu_custom_call.1} parent=19 // pred_check_branch
          %209 = sbr.rel (%p207) target = $region28
        $region27: #{tpu_custom_call.1} parent=19 // pred_region
          %s210 = sand.u32 %s17, 1
          %s211 = scalar_lea.sflag [#allocation6], %s210
          %s212 = sand.u32 %s88, 1
          %s213 = smul.addr %s212, 16
          %s214 = scalar_lea.vmem [#allocation7], %s213
          %s216 = ssub.s32 256, 256
          %217 = vsyncadd %s211, %s216
          %s218 = smul.addr %s24, 2
          %s219 = smul.addr %s218, 128
          %s220 = scalar_lea.hbm %s2, %s219
          %s221 = sshll.u32 %s214, 4
          %s222 = int_to_ptr.vmem [resolvable:$true] %s221
          %227 = dma.hbm_to_vmem [thread:$0]  %s220, 256, %s222, %s211, 128, 128, 8
        $region28: #{tpu_custom_call.1} parent=19 // pred_fallthru
          _
        // Predicated region
        $region29: #{tpu_custom_call.1} parent=19 // pred_check
          %p228 = pneg %p124
        $region30: #{tpu_custom_call.1} parent=19 // pred_check_branch
          %230 = sbr.rel (%p228) target = $region32
        $region31: #{tpu_custom_call.1} parent=19 // pred_region
          %p231 = scmp.lt.s32.totalorder %s24, 3
          %s232 = scalar_select %p231, %s24, 3
          %s233 = scalar_lea.vmem %s3, %s232
        $region32: #{tpu_custom_call.1} parent=19 // pred_fallthru
          _
      $region20: #{tpu_custom_call.1} parent=5 // pred_fallthru
        _
      %p234 = scmp.le.s32.totalorder 1, %s17
      %p235 = scmp.lt.s32.totalorder %s17, 5
      %p236 = pnand %p234, %p235
      %p237 = pneg %p236
      // Predicated region
      $region33: #{tpu_custom_call.1} parent=5 // pred_check
        _
      $region34: #{tpu_custom_call.1} parent=5 // pred_check_branch
        %239 = sbr.rel (%p236) target = $region36
      $region35: #{tpu_custom_call.1} parent=5 // pred_region
        %s240 = ssub.s32 %s17, 1
        // Predicated region
        $region37: #{tpu_custom_call.1} parent=35 // pred_check
          %p241 = pneg %p50
        $region38: #{tpu_custom_call.1} parent=35 // pred_check_branch
          %243 = sbr.rel (%p241) target = $region40
        $region39: #{tpu_custom_call.1} parent=35 // pred_region
          %244 = dma.done [#allocation3], 16
        $region40: #{tpu_custom_call.1} parent=35 // pred_fallthru
          _
        %s245 = sand.u32 %s22, 1
        %s246 = scalar_lea.sflag [#allocation6], %s245
        %s247 = sand.u32 %s65, 1
        %s248 = smul.addr %s247, 8
        %s249 = scalar_lea.vmem [#allocation5], %s248
        // Predicated region
        $region41: #{tpu_custom_call.1} parent=35 // pred_check
          %p250 = pneg %p78
        $region42: #{tpu_custom_call.1} parent=35 // pred_check_branch
          %252 = sbr.rel (%p250) target = $region44
        $region43: #{tpu_custom_call.1} parent=35 // pred_region
          %253 = dma.done %s246, 128
        $region44: #{tpu_custom_call.1} parent=35 // pred_fallthru
          _
        %s254 = sand.u32 %s22, 1
        %s255 = scalar_lea.sflag [#allocation6], %s254
        %s256 = sand.u32 %s91, 1
        %s257 = smul.addr %s256, 16
        %s258 = scalar_lea.vmem [#allocation7], %s257
        // Predicated region
        $region45: #{tpu_custom_call.1} parent=35 // pred_check
          %p259 = pneg %p104
        $region46: #{tpu_custom_call.1} parent=35 // pred_check_branch
          %261 = sbr.rel (%p259) target = $region48
        $region47: #{tpu_custom_call.1} parent=35 // pred_region
          %262 = dma.done %s255, 256
        $region48: #{tpu_custom_call.1} parent=35 // pred_fallthru
          _
        %p263 = pneg %p50
        %p264 = pneg %p47
        %s265 = sand.u32 %s22, 1
        %s266 = scalar_lea.sflag [#allocation6], %s265
        %s267 = sand.u32 %s65, 1
        %s268 = smul.addr %s267, 8
        %s269 = scalar_lea.vmem [#allocation5], %s268
        %p270 = pneg %p78
        %p271 = pneg %p75
        %s272 = sand.u32 %s22, 1
        %s273 = scalar_lea.sflag [#allocation6], %s272
        %s274 = sand.u32 %s91, 1
        %s275 = smul.addr %s274, 16
        %s276 = scalar_lea.vmem [#allocation7], %s275
        %p277 = pneg %p104
        %p278 = pneg %p101
        %p279 = scmp.lt.s32.totalorder %s26, 3
        %s280 = scalar_select %p279, %s26, 3
        %s281 = scalar_lea.vmem %s3, %s280
        %p282 = pneg %p130
        %p283 = pneg %p127
        %p284 = pneg %p158
        %p285 = pneg %p155
        %s286 = sand.u32 %s145, 1
        %s287 = scalar_lea.sflag [#allocation4], %s286
        %s288 = sand.u32 %s145, 1
        %s289 = smul.addr %s288, 8
        %s290 = scalar_lea.vmem [#allocation8], %s289
        %p291 = scmp.lt.s32.totalorder %s26, 3
        %s292 = scalar_select %p291, %s26, 3
        %s293 = scalar_lea.vmem %s3, %s292
        %v294 = vld [vmem:[%s249] sm:$0xff]
        %v295 = vld [vmem:[%s258] sm:$0xff]
        %v296 = vld [vmem:[%s258 + $0x8] sm:$0xff]
        %v297 = vld [vmem:[#allocation2] sm:$0x1]
        %v299 = vlaneseq
        %v300 = vshrl.u32 %v299, 7
        %v301 = vsub.s32 0, %v300
        %v302 = vrot.slane %v297, %v301
        %v304 = vmul.f32 %v294, %v302
        %v305 = vld [vmem:[%s293] sm:$0x1]
        %v307 = vlaneseq
        %v308 = vshrl.u32 %v307, 7
        %v309 = vsub.s32 0, %v308
        %v310 = vrot.slane %v305, %v309
        %vm312 = vcmask 392192
        %v314 = vsel %vm312, %v304, 0
        %v317 = vsel %vm312, %v295, 0
        %v320 = vsel %vm312, %v296, 0
        %322 = vmatprep.subr.mxu0 0.0
        %323 = vmatpush1.xpose.msra.mxu0 %v317
        %324 = vmatprep.subr.mxu0 0.0
        %325 = vmatpush1.xpose.msra.mxu0 %v320
        %326 = vmatprep.subr.mxu0 0.0
        %327 = vmatpush1.xpose.msra.mxu0 0.0
        %328 = vmatprep.subr.mxu0 0.0
        %329 = vmatpush1.xpose.msra.mxu0 0.0
        %330 = vmatprep.subr.mxu0 0.0
        %331 = vmatpush1.xpose.msra.mxu0 0.0
        %332 = vmatprep.subr.mxu0 0.0
        %333 = vmatpush1.xpose.msra.mxu0 0.0
        %334 = vmatprep.subr.mxu0 0.0
        %335 = vmatpush1.xpose.msra.mxu0 0.0
        %336 = vmatprep.subr.mxu0 0.0
        %337 = vmatpush1.xpose.msra.mxu0 0.0
        %338 = vmatprep.subr.mxu0 0.0
        %339 = vmatpush1.xpose.msra.mxu0 0.0
        %340 = vmatprep.subr.mxu0 0.0
        %341 = vmatpush1.xpose.msra.mxu0 0.0
        %342 = vmatprep.subr.mxu0 0.0
        %343 = vmatpush1.xpose.msra.mxu0 0.0
        %344 = vmatprep.subr.mxu0 0.0
        %345 = vmatpush1.xpose.msra.mxu0 0.0
        %346 = vmatprep.subr.mxu0 0.0
        %347 = vmatpush1.xpose.msra.mxu0 0.0
        %348 = vmatprep.subr.mxu0 0.0
        %349 = vmatpush1.xpose.msra.mxu0 0.0
        %350 = vmatprep.subr.mxu0 0.0
        %351 = vmatpush1.xpose.msra.mxu0 0.0
        %352 = vmatprep.subr.mxu0 0.0
        %353 = vmatpush1.xpose.msra.mxu0 0.0
        %354 = vmatprep.subr.mxu0 0.0
        %355 = vmatpush1.xpose.msra.mxu0 0.0
        %356 = vmatprep.subr.mxu0 0.0
        %357 = vmatpush1.xpose.msra.mxu0 0.0
        %358 = vmatprep.subr.mxu0 0.0
        %359 = vmatpush1.xpose.msra.mxu0 0.0
        %360 = vmatprep.subr.mxu0 0.0
        %361 = vmatpush1.xpose.msra.mxu0 0.0
        %362 = vmatprep.subr.mxu0 0.0
        %363 = vmatpush1.xpose.msra.mxu0 0.0
        %364 = vmatprep.subr.mxu0 0.0
        %365 = vmatpush1.xpose.msra.mxu0 0.0
        %366 = vmatprep.subr.mxu0 0.0
        %367 = vmatpush1.xpose.msra.mxu0 0.0
        %368 = vmatprep.subr.mxu0 0.0
        %369 = vmatpush1.xpose.msra.mxu0 0.0
        %370 = vmatprep.subr.mxu0 0.0
        %371 = vmatpush1.xpose.msra.mxu0 0.0
        %372 = vmatprep.subr.mxu0 0.0
        %373 = vmatpush1.xpose.msra.mxu0 0.0
        %374 = vmatprep.subr.mxu0 0.0
        %375 = vmatpush1.xpose.msra.mxu0 0.0
        %376 = vmatprep.subr.mxu0 0.0
        %377 = vmatpush1.xpose.msra.mxu0 0.0
        %378 = vmatprep.subr.mxu0 0.0
        %379 = vmatpush1.xpose.msra.mxu0 0.0
        %380 = vmatprep.subr.mxu0 0.0
        %381 = vmatpush1.xpose.msra.mxu0 0.0
        %382 = vmatprep.subr.mxu0 0.0
        %383 = vmatpush1.xpose.msra.mxu0 0.0
        %384 = vmatprep.subr.mxu0 0.0
        %385 = vmatpush1.xpose.msra.mxu0 0.0
        %386 = vmatprep.mubr.f32.mxu0 0.0
        %387 = vmatmul.mubr.f32.gmra.mrb[0].mxu0 %v314
        %v388 = vpop.f32.mrb[0].mxu0
        %v389 = vadd.f32 %v310, %v388
        %v390 = vpop.f32.mrb[0].mxu0
        %391 = vdwg.mxu0
        %vm392 = vcmask 130048
        %v393 = vsel %vm392, %v389, -inf
        %394 = vmax.xlane.f32.xlu0 %v393
        %v395 = vpop.xlane.xlu0 %394
        %v396 = vsub.f32 %v389, %v395
        %v397 = vmul.f32 %v396, 1.442695
        %v398 = vpow.pop %v397
        %v399 = vsel %vm392, %v398, 0.0
        %400 = vadd.xlane.f32.xlu0 %v399
        %v401 = vpop.xlane.xlu0 %400
        %v402 = vrcp.pop %v401
        %v403 = vmul.f32 %v398, %v402
        %404 = vst.msk [vmem:[%s290] sm:$0xff] %vm392, %v403
        %s405 = sand.u32 %s145, 1
        %s406 = scalar_lea.sflag [#allocation4], %s405
        %s407 = sand.u32 %s145, 1
        %s408 = smul.addr %s407, 8
        %s409 = scalar_lea.vmem [#allocation8], %s408
        // Predicated region
        $region49: #{tpu_custom_call.1} parent=35 // pred_check
          %p410 = pneg %p155
        $region50: #{tpu_custom_call.1} parent=35 // pred_check_branch
          %412 = sbr.rel (%p410) target = $region52
        $region51: #{tpu_custom_call.1} parent=35 // pred_region
          %s414 = ssub.s32 128, 128
          %415 = vsyncadd %s406, %s414
          %s416 = sadd.s32 %s27, %s26
          %s417 = smul.addr %s416, 128
          %s418 = scalar_lea.hbm %s4, %s417
          %s420 = sshll.u32 %s409, 4
          %s421 = int_to_ptr.vmem [resolvable:$true] %s420
          %423 = dma.vmem_to_hbm [thread:$0]  %s421, 128, %s418, %s406
        $region52: #{tpu_custom_call.1} parent=35 // pred_fallthru
          _
      $region36: #{tpu_custom_call.1} parent=5 // pred_fallthru
        _
      %p424 = scmp.le.s32.totalorder 2, %s17
      // Predicated region
      $region53: #{tpu_custom_call.1} parent=5 // pred_check
        %p425 = pneg %p424
      $region54: #{tpu_custom_call.1} parent=5 // pred_check_branch
        %427 = sbr.rel (%p425) target = $region56
      $region55: #{tpu_custom_call.1} parent=5 // pred_region
        %s428 = ssub.s32 %s17, 2
        // Predicated region
        $region57: #{tpu_custom_call.1} parent=55 // pred_check
          %p429 = pneg %p161
        $region58: #{tpu_custom_call.1} parent=55 // pred_check_branch
          %431 = sbr.rel (%p429) target = $region60
        $region59: #{tpu_custom_call.1} parent=55 // pred_region
          %s432 = sand.u32 %s146, 1
          %s433 = scalar_lea.sflag [#allocation4], %s432
          %s434 = sand.u32 %s146, 1
          %s435 = smul.addr %s434, 8
          %s436 = scalar_lea.vmem [#allocation8], %s435
          %437 = dma.done %s433, 128
        $region60: #{tpu_custom_call.1} parent=55 // pred_fallthru
          _
      $region56: #{tpu_custom_call.1} parent=5 // pred_fallthru
        _
    $region6: #{tpu_custom_call.1} parent=1 // loop_footer
      %s21 = sadd.s32 1, %s17
    $region7: #{tpu_custom_call.1} parent=1 // loop_footer_branch
      %16 = sbr.rel target = $region3
    $region8: #{tpu_custom_call.1} parent=1 // loop_exit
      _
    %438 = vsyncpa [#allocation3], 1
    %s439 = scalar_lea.sflag [#allocation3], 1
    %440 = vsyncpa %s439, 1
    %441 = vsyncpa [#allocation6], 1
    %s442 = scalar_lea.sflag [#allocation6], 1
    %443 = vsyncpa %s442, 1
    %444 = vsyncpa [#allocation4], 1
    %s445 = scalar_lea.sflag [#allocation4], 1
    %446 = vsyncpa %s445, 1

</llo_original>
